<compile_context>
chip_gen: v7x
topology: tpu7x:2x2x1
jax: 0.10.0
libtpu: 0.0.40
codegen_flags: <defaults>
</compile_context>

<pallas_src>
import math

import jax
import jax.numpy as jnp
from jax.experimental import pallas as pl
from jax.experimental.pallas import tpu as pltpu


def _round_up(a, b):
    return (a + b - 1) // b * b


def _pad2(a, r, c):
    return jnp.pad(a, ((0, r - a.shape[0]), (0, c - a.shape[1])))


# --------------------------------------------------------------------------
# Stage 1: support = x @ W   (row-tiled; W resident across grid steps)
# --------------------------------------------------------------------------
def _support_kernel(x_ref, w_ref, o_ref):
    o_ref[...] = jnp.dot(
        x_ref[...], w_ref[...], preferred_element_type=jnp.float32
    ).astype(o_ref.dtype)


def _support(x, w, *, tm, out_dtype):
    n, f = x.shape
    c = w.shape[1]
    flops = 2 * n * f * c
    bytes_accessed = (
        n * f * x.dtype.itemsize
        + f * c * w.dtype.itemsize
        + n * c * jnp.dtype(out_dtype).itemsize
    )
    return pl.pallas_call(
        _support_kernel,
        out_shape=jax.ShapeDtypeStruct((n, c), out_dtype),
        grid=(n // tm,),
        in_specs=[
            pl.BlockSpec((tm, f), lambda i: (i, 0)),
            pl.BlockSpec((f, c), lambda i: (0, 0)),  # weight resident (constant block)
        ],
        out_specs=pl.BlockSpec((tm, c), lambda i: (i, 0)),
        compiler_params=pltpu.CompilerParams(dimension_semantics=("parallel",)),
        cost_estimate=pl.CostEstimate(
            flops=flops, transcendentals=0, bytes_accessed=bytes_accessed
        ),
    )(x, w)


# --------------------------------------------------------------------------
# Stage 2: out = ReLU(adj @ support + b)   ((rows, reduction) grid + f32 accumulator)
# --------------------------------------------------------------------------
def _aggregate_kernel(adj_ref, s_ref, b_ref, o_ref, acc_ref):
    k = pl.program_id(1)

    @pl.when(k == 0)
    def _init():
        acc_ref[...] = jnp.zeros_like(acc_ref)

    acc_ref[...] += jnp.dot(
        adj_ref[...], s_ref[...], preferred_element_type=jnp.float32
    )

    @pl.when(k == pl.num_programs(1) - 1)
    def _finalize():
        # bias add + ReLU only once, in the finalize (keeps the k-loop pure MXU+acc)
        o_ref[...] = jnp.maximum(acc_ref[...] + b_ref[...], 0.0).astype(o_ref.dtype)


def _aggregate(adj, s, b, *, tm, tk, out_dtype):
    n = adj.shape[0]
    c = s.shape[1]
    flops = 2 * n * n * c
    bytes_accessed = (
        n * n * adj.dtype.itemsize
        + n * c * s.dtype.itemsize
        + c * 4
        + n * c * jnp.dtype(out_dtype).itemsize
    )
    return pl.pallas_call(
        _aggregate_kernel,
        out_shape=jax.ShapeDtypeStruct((n, c), out_dtype),
        grid=(n // tm, n // tk),
        in_specs=[
            pl.BlockSpec((tm, tk), lambda i, k: (i, k)),  # adj tile (streamed)
            pl.BlockSpec((tk, c), lambda i, k: (k, 0)),   # support tile (streamed)
            pl.BlockSpec((1, c), lambda i, k: (0, 0)),    # bias (resident)
        ],
        out_specs=pl.BlockSpec((tm, c), lambda i, k: (i, 0)),
        scratch_shapes=[pltpu.VMEM((tm, c), jnp.float32)],
        compiler_params=pltpu.CompilerParams(
            dimension_semantics=("parallel", "arbitrary")
        ),
        cost_estimate=pl.CostEstimate(
            flops=flops, transcendentals=0, bytes_accessed=bytes_accessed
        ),
    )(adj, s, b)


# --------------------------------------------------------------------------
# Full GCN forward
# --------------------------------------------------------------------------
def gcn_forward(x, adj, w1, b1, w2, b2, *, tm=256, tk=512,
                compute_dtype=jnp.bfloat16):
    n, nfeat = x.shape
    nhid = w1.shape[1]
    nout = w2.shape[1]

    # Pad N to the tile grid, feature dims to lane-dense multiples of 128.
    np_ = _round_up(n, 128)
    tm = min(tm, np_)
    tk = min(tk, np_)
    np_ = _round_up(np_, math.lcm(tm, tk))
    fp = _round_up(nfeat, 128)
    hp = _round_up(nhid, 128)
    op = _round_up(nout, 128)

    # bf16 MXU inputs (f32 accumulation inside the kernels); zero padding keeps math exact.
    xd = _pad2(x, np_, fp).astype(compute_dtype)
    adjd = _pad2(adj, np_, np_).astype(compute_dtype)
    w1d = _pad2(w1, fp, hp).astype(compute_dtype)
    w2d = _pad2(w2, hp, op).astype(compute_dtype)
    b1d = jnp.pad(b1, (0, hp - nhid)).reshape(1, hp).astype(jnp.float32)
    b2d = jnp.pad(b2, (0, op - nout)).reshape(1, op).astype(jnp.float32)

    # gc1
    s1 = _support(xd, w1d, tm=tm, out_dtype=compute_dtype)                 # [Np, Hp]
    h = _aggregate(adjd, s1, b1d, tm=tm, tk=tk, out_dtype=compute_dtype)   # ReLU inside
    # dropout (eval mode): identity
    # gc2
    s2 = _support(h, w2d, tm=tm, out_dtype=compute_dtype)                  # [Np, Op]
    y = _aggregate(adjd, s2, b2d, tm=tm, tk=tk, out_dtype=jnp.float32)     # ReLU inside

    return y[:n, :nout]


def _init_gc_params(key, in_features, out_features):
    # Mirrors GraphConvolution.reset_parameters: uniform(-stdv, stdv), stdv=1/sqrt(out)
    stdv = 1.0 / math.sqrt(out_features)
    kw, kb = jax.random.split(key)
    w = jax.random.uniform(kw, (in_features, out_features), jnp.float32, -stdv, stdv)
    b = jax.random.uniform(kb, (out_features,), jnp.float32, -stdv, stdv)
    return w, b


def _ref_forward(x, adj, w1, b1, w2, b2, dtype):
    # Pure-JAX reference mirroring the kernel's precision path (bf16 MXU, f32 accum).
    f32 = jnp.float32
    xd = x.astype(dtype)
    ad = adj.astype(dtype)
    s1 = jnp.dot(xd, w1.astype(dtype), preferred_element_type=f32).astype(dtype)
    h = jnp.maximum(jnp.dot(ad, s1, preferred_element_type=f32) + b1[None, :], 0.0)
    h = h.astype(dtype)
    s2 = jnp.dot(h, w2.astype(dtype), preferred_element_type=f32).astype(dtype)
    y = jnp.maximum(jnp.dot(ad, s2, preferred_element_type=f32) + b2[None, :], 0.0)
    return y


if __name__ == "__main__":
    key = jax.random.PRNGKey(0)
    k_x, k_adj, k_gc1, k_gc2 = jax.random.split(key, 4)

    # Small but tiling-exercising shapes: N=256 nodes, nfeat=64, nhid=32, out=16
    N, NFEAT, NHID, NOUT = 256, 64, 32, 16

    x = jax.random.normal(k_x, (N, NFEAT), jnp.float32)
    # Symmetric, row-normalized adjacency (dense; torch.spmm semantics == dense matmul)
    a = jax.random.uniform(k_adj, (N, N), jnp.float32)
    adj = (a + a.T) * 0.5 + jnp.eye(N, dtype=jnp.float32)
    adj = adj / jnp.sum(adj, axis=1, keepdims=True)

    w1, b1 = _init_gc_params(k_gc1, NFEAT, NHID)
    w2, b2 = _init_gc_params(k_gc2, NHID, NOUT)

    # tm=tk=128 -> (2,2) aggregate grid: exercises accumulator init/finalize + parallel axis
    out = gcn_forward(x, adj, w1, b1, w2, b2, tm=128, tk=128)
    out = jax.block_until_ready(out)

    ref = _ref_forward(x, adj, w1, b1, w2, b2, jnp.bfloat16)
    assert out.shape == (N, NOUT)
    max_err = float(jnp.max(jnp.abs(out - ref)))
    assert jnp.allclose(out, ref, atol=1e-2, rtol=1e-2), max_err

    print("KERNEL_OK")
</pallas_src>

<mosaic_0001>
module attributes {stable_mosaic.version = 11 : i64} {
  func.func @_support_kernel(%arg0: i32, %arg1: memref<128x128xbf16, #tpu.memory_space<vmem>>, %arg2: memref<128x128xbf16, #tpu.memory_space<vmem>>, %arg3: memref<128x128xbf16, #tpu.memory_space<vmem>>) attributes {dimension_semantics = [#tpu.dimension_semantics<parallel>], iteration_bounds = array<i64: 2>, scalar_prefetch = 0 : i64, scratch_operands = 0 : i64, tpu.core_type = #tpu.core_type<tc>, window_params = [{transform_indices = @transform_0, window_bounds = array<i64: 128, 128>}, {pipeline_mode = #tpu.pipeline_mode<synchronous>, transform_indices = @transform_1, window_bounds = array<i64: 128, 128>}, {transform_indices = @transform_2, window_bounds = array<i64: 128, 128>}]} {
    %c0 = arith.constant 0 : index
    %c0_0 = arith.constant 0 : index
    %0 = vector.load %arg1[%c0, %c0_0] : memref<128x128xbf16, #tpu.memory_space<vmem>>, vector<128x128xbf16>
    %c0_1 = arith.constant 0 : index
    %c0_2 = arith.constant 0 : index
    %1 = vector.load %arg2[%c0_1, %c0_2] : memref<128x128xbf16, #tpu.memory_space<vmem>>, vector<128x128xbf16>
    %cst = arith.constant dense<0.000000e+00> : vector<128x128xf32>
    %2 = tpu.matmul %0, %1, %cst {dimension_numbers = #tpu.dot_dimension_numbers<[1], [0], [0], [1], [0, 0, 1, 1], [], []>} : vector<128x128xbf16>, vector<128x128xbf16>, vector<128x128xf32> -> vector<128x128xf32>
    %3 = arith.truncf %2 : vector<128x128xf32> to vector<128x128xbf16>
    %c0_3 = arith.constant 0 : index
    %c0_4 = arith.constant 0 : index
    %4 = vector.load %arg3[%c0_3, %c0_4] : memref<128x128xbf16, #tpu.memory_space<vmem>>, vector<128x128xbf16>
    tpu.vector_store %arg3[%c0_3, %c0_4], %3 {strides = array<i32>} : memref<128x128xbf16, #tpu.memory_space<vmem>>, vector<128x128xbf16>,
    return
  }
  func.func @transform_0(%arg0: i32) -> (i32, i32) {
    %c0_i32 = arith.constant 0 : i32
    %c0_i32_0 = arith.constant 0 : i32
    return %arg0, %c0_i32 : i32, i32
  }
  func.func @transform_1(%arg0: i32) -> (i32, i32) {
    %c0_i32 = arith.constant 0 : i32
    %c0_i32_0 = arith.constant 0 : i32
    %c0_i32_1 = arith.constant 0 : i32
    return %c0_i32, %c0_i32_0 : i32, i32
  }
  func.func @transform_2(%arg0: i32) -> (i32, i32) {
    %c0_i32 = arith.constant 0 : i32
    %c0_i32_0 = arith.constant 0 : i32
    return %arg0, %c0_i32 : i32, i32
  }
}

</mosaic_0001>

<llo_original>
// kernel: tpu_custom_call.1
$region0: #{tpu_custom_call.1}
  #allocation0 [shape = 'u32[]', space=smem, size = 0x4, offset = 0x4, fixed_abs, tag = 'smem constant byte address 0x4 - core index']
  #allocation1 [shape = 'u32[144,128]{1,0:T(1,128)}', space=vmem, size = 0x12000, scoped, tag = 'internal scratch']
  %s0 = inlined_call_operand.hbm [shape: bf16[256,128], index: 0, kind: input, shape index: {}]
  %s1 = inlined_call_operand.hbm [shape: bf16[128,128], index: 1, kind: input, shape index: {}]
  %s2 = inlined_call_operand.hbm [shape: bf16[256,128], index: 2, kind: output, shape index: {}]
  %s3 = sld [smem:[#allocation0]]
  $region49: #{tpu_custom_call.1} parent=0
    _
  %s5 = ssub.s32 1, %s3
  %s6 = scalar_select 0, %s5, %s3
  $region1: #{tpu_custom_call.1} parent=0
    #allocation2 [shape = 'u8[65536]{0}', space=vmem, size = 0x10000, scoped, tag = 'input window, operand 0']
    #allocation3 [shape = 's32[2]{0}', space=sflag, size = 0x8, scoped, tag = 'scoped memory for tpu_custom_call.1']
    #allocation4 [shape = 's32[2]{0}', space=sflag, size = 0x8, scoped, tag = 'scoped memory for tpu_custom_call.1']
    #allocation5 [shape = 'u8[32768]{0}', space=vmem, size = 0x8000, scoped, tag = 'input window, operand 1, single buffered']
    #allocation6 [shape = 's32[1]{0}', space=sflag, size = 0x4, scoped, tag = 'scoped memory for tpu_custom_call.1']
    #allocation7 [shape = 'u8[65536]{0}', space=vmem, size = 0x10000, scoped, tag = 'output window, operand 0']
    %7 = vsyncpa [#allocation3], 0
    %s8 = scalar_lea.sflag [#allocation3], 1
    %9 = vsyncpa %s8, 0
    %10 = vsyncpa [#allocation6], 0
    %11 = vsyncpa [#allocation4], 0
    %s12 = scalar_lea.sflag [#allocation4], 1
    %13 = vsyncpa %s12, 0
    loop: start=0, step=1, limit=4
    $region2: #{tpu_custom_call.1} parent=1 // loop_pre_header
      _
    $region3: #{tpu_custom_call.1} parent=1 // loop_header
      %s15 = sphi 0, %s19
      %p16 = scmp.ge.s32.totalorder %s15, 4
      %s25 = sphi 0, %s27
      %s28 = sphi 0, %s25
      %s29 = sphi 0, %s28
      %s45 = sphi 0, %s29
      %s49 = sphi 0, %s49
      %s51 = sphi 0, %s49
      %s52 = sphi 0, %s51
      %s66 = sphi 0, %s52
      %s72 = sphi 0, %s74
      %s75 = sphi 0, %s72
      %s76 = sphi 0, %s75
      %s92 = sphi 0, %s76
    $region4: #{tpu_custom_call.1} parent=1 // loop_header_branch
      %18 = sbr.rel (%p16) target = $region8
    $region5: #{tpu_custom_call.1} parent=1 // loop_body
      %s20 = ssub.s32 %s15, 1
      %s21 = ssub.s32 %s15, 2
      %s22 = sadd.s32 %s15, 1
      %s23 = ssub.s32 %s15, %s22
      %p24 = scmp.eq.s32.totalorder %s23, 0
      %s26 = sadd.s32 %s25, 1
      %s27 = scalar_select %p24, %s25, %s26
      %p30 = pneg %p24
      %p31 = scmp.eq.s32.totalorder %s15, 1
      %p32 = por %p30, %p31
      %p33 = scmp.ne.s32.totalorder %s25, %s28
      %p34 = scmp.eq.s32.totalorder %s15, 0
      %p35 = por %p33, %p34
      %p36 = scmp.ne.s32.totalorder %s25, %s28
      %p37 = scmp.eq.s32.totalorder %s20, 1
      %p38 = por %p36, %p37
      %p39 = scmp.ne.s32.totalorder %s28, %s29
      %p40 = scmp.eq.s32.totalorder %s20, 0
      %p41 = por %p39, %p40
      %p42 = scmp.ne.s32.totalorder %s28, %s29
      %p43 = scmp.eq.s32.totalorder %s21, 1
      %p44 = por %p42, %p43
      %p46 = scmp.ne.s32.totalorder %s29, %s45
      %p47 = scmp.eq.s32.totalorder %s21, 0
      %p48 = por %p46, %p47
      %s50 = sadd.s32 %s49, 1
      %p53 = scmp.eq.s32.totalorder %s15, 1
      %p54 = scmp.ne.s32.totalorder %s49, %s51
      %p55 = scmp.eq.s32.totalorder %s15, 0
      %p56 = por %p54, %p55
      %p57 = scmp.ne.s32.totalorder %s49, %s51
      %p58 = scmp.eq.s32.totalorder %s20, 1
      %p59 = por %p57, %p58
      %p60 = scmp.ne.s32.totalorder %s51, %s52
      %p61 = scmp.eq.s32.totalorder %s20, 0
      %p62 = por %p60, %p61
      %p63 = scmp.ne.s32.totalorder %s51, %s52
      %p64 = scmp.eq.s32.totalorder %s21, 1
      %p65 = por %p63, %p64
      %p67 = scmp.ne.s32.totalorder %s52, %s66
      %p68 = scmp.eq.s32.totalorder %s21, 0
      %p69 = por %p67, %p68
      %s70 = ssub.s32 %s15, %s22
      %p71 = scmp.eq.s32.totalorder %s70, 0
      %s73 = sadd.s32 %s72, 1
      %s74 = scalar_select %p71, %s72, %s73
      %p77 = pneg %p71
      %p78 = scmp.eq.s32.totalorder %s15, 1
      %p79 = por %p77, %p78
      %p80 = scmp.ne.s32.totalorder %s72, %s75
      %p81 = scmp.eq.s32.totalorder %s15, 0
      %p82 = por %p80, %p81
      %p83 = scmp.ne.s32.totalorder %s72, %s75
      %p84 = scmp.eq.s32.totalorder %s20, 1
      %p85 = por %p83, %p84
      %p86 = scmp.ne.s32.totalorder %s75, %s76
      %p87 = scmp.eq.s32.totalorder %s20, 0
      %p88 = por %p86, %p87
      %p89 = scmp.ne.s32.totalorder %s75, %s76
      %p90 = scmp.eq.s32.totalorder %s21, 1
      %p91 = por %p89, %p90
      %p93 = scmp.ne.s32.totalorder %s76, %s92
      %p94 = scmp.eq.s32.totalorder %s21, 0
      %p95 = por %p93, %p94
      %p96 = scmp.le.s32.totalorder 1, %s15
      %p97 = scmp.lt.s32.totalorder %s15, 3
      %p98 = pnand %p96, %p97
      %p99 = pneg %p98
      // Predicated region
      $region9: #{tpu_custom_call.1} parent=5 // pred_check
        _
      $region10: #{tpu_custom_call.1} parent=5 // pred_check_branch
        %101 = sbr.rel (%p98) target = $region12
      $region11: #{tpu_custom_call.1} parent=5 // pred_region
        %s102 = ssub.s32 %s15, 1
        // Predicated region
        $region13: #{tpu_custom_call.1} parent=11 // pred_check
          %p103 = pneg %p62
        $region14: #{tpu_custom_call.1} parent=11 // pred_check_branch
          %105 = sbr.rel (%p103) target = $region16
        $region15: #{tpu_custom_call.1} parent=11 // pred_region
          %s107 = ssub.s32 1024, 1024
          %108 = vsyncadd [#allocation6], %s107
          %s109 = sshll.u32 [#allocation5], 4
          %s110 = int_to_ptr.vmem [resolvable:$true] %s109
          %115 = dma.hbm_to_vmem [thread:$0]  %s1, 1024, %s110, [#allocation6], 64, 64, 4
        $region16: #{tpu_custom_call.1} parent=11 // pred_fallthru
          _
      $region12: #{tpu_custom_call.1} parent=5 // pred_fallthru
        _
      %p116 = scmp.lt.s32.totalorder %s15, 2
      // Predicated region
      $region17: #{tpu_custom_call.1} parent=5 // pred_check
        %p117 = pneg %p116
      $region18: #{tpu_custom_call.1} parent=5 // pred_check_branch
        %119 = sbr.rel (%p117) target = $region20
      $region19: #{tpu_custom_call.1} parent=5 // pred_region
        // Predicated region
        $region21: #{tpu_custom_call.1} parent=19 // pred_check
          %p120 = pneg %p35
        $region22: #{tpu_custom_call.1} parent=19 // pred_check_branch
          %122 = sbr.rel (%p120) target = $region24
        $region23: #{tpu_custom_call.1} parent=19 // pred_region
          %s123 = sand.u32 %s25, 1
          %s124 = scalar_lea.sflag [#allocation3], %s123
          %s125 = sand.u32 %s25, 1
          %s126 = smul.addr %s125, 64
          %s127 = scalar_lea.vmem [#allocation2], %s126
          %s128 = smul.u32 16, %s15
          %s130 = ssub.s32 1024, 1024
          %131 = vsyncadd %s124, %s130
          %s132 = smul.addr %s128, 64
          %s133 = scalar_lea.hbm %s0, %s132
          %s134 = sshll.u32 %s127, 4
          %s135 = int_to_ptr.vmem [resolvable:$true] %s134
          %140 = dma.hbm_to_vmem [thread:$0]  %s133, 1024, %s135, %s124, 64, 64, 4
        $region24: #{tpu_custom_call.1} parent=19 // pred_fallthru
          _
      $region20: #{tpu_custom_call.1} parent=5 // pred_fallthru
        _
      %p141 = scmp.le.s32.totalorder 1, %s15
      %p142 = scmp.lt.s32.totalorder %s15, 3
      %p143 = pnand %p141, %p142
      %p144 = pneg %p143
      // Predicated region
      $region25: #{tpu_custom_call.1} parent=5 // pred_check
        _
      $region26: #{tpu_custom_call.1} parent=5 // pred_check_branch
        %146 = sbr.rel (%p143) target = $region28
      $region27: #{tpu_custom_call.1} parent=5 // pred_region
        %s147 = ssub.s32 %s15, 1
        %s148 = sand.u32 %s28, 1
        %s149 = scalar_lea.sflag [#allocation3], %s148
        %s150 = sand.u32 %s28, 1
        %s151 = smul.addr %s150, 64
        %s152 = scalar_lea.vmem [#allocation2], %s151
        // Predicated region
        $region29: #{tpu_custom_call.1} parent=27 // pred_check
          %p153 = pneg %p41
        $region30: #{tpu_custom_call.1} parent=27 // pred_check_branch
          %155 = sbr.rel (%p153) target = $region32
        $region31: #{tpu_custom_call.1} parent=27 // pred_region
          %156 = dma.done %s149, 1024
        $region32: #{tpu_custom_call.1} parent=27 // pred_fallthru
          _
        // Predicated region
        $region33: #{tpu_custom_call.1} parent=27 // pred_check
          %p157 = pneg %p62
        $region34: #{tpu_custom_call.1} parent=27 // pred_check_branch
          %159 = sbr.rel (%p157) target = $region36
        $region35: #{tpu_custom_call.1} parent=27 // pred_region
          %160 = dma.done [#allocation6], 1024
        $region36: #{tpu_custom_call.1} parent=27 // pred_fallthru
          _
        %s161 = sand.u32 %s28, 1
        %s162 = scalar_lea.sflag [#allocation3], %s161
        %s163 = sand.u32 %s28, 1
        %s164 = smul.addr %s163, 64
        %s165 = scalar_lea.vmem [#allocation2], %s164
        %p166 = pneg %p41
        %p167 = pneg %p38
        %p168 = pneg %p62
        %p169 = pneg %p59
        %p170 = pneg %p88
        %p171 = pneg %p85
        %s172 = sand.u32 %s75, 1
        %s173 = scalar_lea.sflag [#allocation4], %s172
        %s174 = sand.u32 %s75, 1
        %s175 = smul.addr %s174, 64
        %s176 = scalar_lea.vmem [#allocation7], %s175
        %s177 = smul.u32 16, %s20
        %s178 = smul.u32 16, %s20
        %v180 = vld [vmem:[%s152] sm:$0xf]
        %v181 = vld [vmem:[%s152 + $0x4] sm:$0xf]
        %v182 = vld [vmem:[%s152 + $0x8] sm:$0xf]
        %v183 = vld [vmem:[%s152 + $0xc] sm:$0xf]
        %v184 = vld [vmem:[%s152 + $0x10] sm:$0xf]
        %v185 = vld [vmem:[%s152 + $0x14] sm:$0xf]
        %v186 = vld [vmem:[%s152 + $0x18] sm:$0xf]
        %v187 = vld [vmem:[%s152 + $0x1c] sm:$0xf]
        %v188 = vld [vmem:[%s152 + $0x20] sm:$0xf]
        %v189 = vld [vmem:[%s152 + $0x24] sm:$0xf]
        %v190 = vld [vmem:[%s152 + $0x28] sm:$0xf]
        %v191 = vld [vmem:[%s152 + $0x2c] sm:$0xf]
        %v192 = vld [vmem:[%s152 + $0x30] sm:$0xf]
        %v193 = vld [vmem:[%s152 + $0x34] sm:$0xf]
        %v194 = vld [vmem:[%s152 + $0x38] sm:$0xf]
        %v195 = vld [vmem:[%s152 + $0x3c] sm:$0xf]
        %v196 = vld [vmem:[#allocation5] sm:$0xf]
        %v197 = vld [vmem:[#allocation5 + $0x4] sm:$0xf]
        %v198 = vld [vmem:[#allocation5 + $0x8] sm:$0xf]
        %v199 = vld [vmem:[#allocation5 + $0xc] sm:$0xf]
        %v200 = vld [vmem:[#allocation5 + $0x10] sm:$0xf]
        %v201 = vld [vmem:[#allocation5 + $0x14] sm:$0xf]
        %v202 = vld [vmem:[#allocation5 + $0x18] sm:$0xf]
        %v203 = vld [vmem:[#allocation5 + $0x1c] sm:$0xf]
        %v204 = vld [vmem:[#allocation5 + $0x20] sm:$0xf]
        %v205 = vld [vmem:[#allocation5 + $0x24] sm:$0xf]
        %v206 = vld [vmem:[#allocation5 + $0x28] sm:$0xf]
        %v207 = vld [vmem:[#allocation5 + $0x2c] sm:$0xf]
        %v208 = vld [vmem:[#allocation5 + $0x30] sm:$0xf]
        %v209 = vld [vmem:[#allocation5 + $0x34] sm:$0xf]
        %v210 = vld [vmem:[#allocation5 + $0x38] sm:$0xf]
        %v211 = vld [vmem:[#allocation5 + $0x3c] sm:$0xf]
        %v228 = vunpack.c.l.b16 %v180
        %v229 = vunpack.c.l.b16 %v181
        %v230 = vunpack.c.l.b16 %v182
        %v231 = vunpack.c.l.b16 %v183
        %v232 = vunpack.c.l.b16 %v184
        %v233 = vunpack.c.l.b16 %v185
        %v234 = vunpack.c.l.b16 %v186
        %v235 = vunpack.c.l.b16 %v187
        %v236 = vunpack.c.l.b16 %v188
        %v237 = vunpack.c.l.b16 %v189
        %v238 = vunpack.c.l.b16 %v190
        %v239 = vunpack.c.l.b16 %v191
        %v240 = vunpack.c.l.b16 %v192
        %v241 = vunpack.c.l.b16 %v193
        %v242 = vunpack.c.l.b16 %v194
        %v243 = vunpack.c.l.b16 %v195
        %v244 = vpack.c.b16 %v229, %v228
        %v245 = vpack.c.b16 %v231, %v230
        %v246 = vpack.c.b16 %v233, %v232
        %v247 = vpack.c.b16 %v235, %v234
        %v248 = vpack.c.b16 %v237, %v236
        %v249 = vpack.c.b16 %v239, %v238
        %v250 = vpack.c.b16 %v241, %v240
        %v251 = vpack.c.b16 %v243, %v242
        %v276 = vunpack.c.l.b16 %v196
        %v277 = vunpack.c.l.b16 %v197
        %v278 = vunpack.c.l.b16 %v198
        %v279 = vunpack.c.l.b16 %v199
        %v280 = vunpack.c.l.b16 %v200
        %v281 = vunpack.c.l.b16 %v201
        %v282 = vunpack.c.l.b16 %v202
        %v283 = vunpack.c.l.b16 %v203
        %v284 = vunpack.c.l.b16 %v204
        %v285 = vunpack.c.l.b16 %v205
        %v286 = vunpack.c.l.b16 %v206
        %v287 = vunpack.c.l.b16 %v207
        %v288 = vunpack.c.l.b16 %v208
        %v289 = vunpack.c.l.b16 %v209
        %v290 = vunpack.c.l.b16 %v210
        %v291 = vunpack.c.l.b16 %v211
        %v292 = vpack.c.b16 %v277, %v276
        %v293 = vpack.c.b16 %v279, %v278
        %v294 = vpack.c.b16 %v281, %v280
        %v295 = vpack.c.b16 %v283, %v282
        %v296 = vpack.c.b16 %v285, %v284
        %v297 = vpack.c.b16 %v287, %v286
        %v298 = vpack.c.b16 %v289, %v288
        %v299 = vpack.c.b16 %v291, %v290
        %308 = vmatprep.subr.bf16.mxu0 0
        %309 = vmatpush1.bf16.msra.mxu0 %v292
        %310 = vmatprep.subr.bf16.mxu0 0
        %311 = vmatpush1.bf16.msra.mxu0 %v293
        %312 = vmatprep.subr.bf16.mxu0 0
        %313 = vmatpush1.bf16.msra.mxu0 %v294
        %314 = vmatprep.subr.bf16.mxu0 0
        %315 = vmatpush1.bf16.msra.mxu0 %v295
        %316 = vmatprep.subr.bf16.mxu0 0
        %317 = vmatpush1.bf16.msra.mxu0 %v296
        %318 = vmatprep.subr.bf16.mxu0 0
        %319 = vmatpush1.bf16.msra.mxu0 %v297
        %320 = vmatprep.subr.bf16.mxu0 0
        %321 = vmatpush1.bf16.msra.mxu0 %v298
        %322 = vmatprep.subr.bf16.mxu0 0
        %323 = vmatpush1.bf16.msra.mxu0 %v299
        %324 = vmatprep.subr.bf16.mxu0 0
        %325 = vmatpush1.bf16.msra.mxu0 0
        %326 = vmatprep.subr.bf16.mxu0 0
        %327 = vmatpush1.bf16.msra.mxu0 0
        %328 = vmatprep.subr.bf16.mxu0 0
        %329 = vmatpush1.bf16.msra.mxu0 0
        %330 = vmatprep.subr.bf16.mxu0 0
        %331 = vmatpush1.bf16.msra.mxu0 0
        %332 = vmatprep.subr.bf16.mxu0 0
        %333 = vmatpush1.bf16.msra.mxu0 0
        %334 = vmatprep.subr.bf16.mxu0 0
        %335 = vmatpush1.bf16.msra.mxu0 0
        %336 = vmatprep.subr.bf16.mxu0 0
        %337 = vmatpush1.bf16.msra.mxu0 0
        %338 = vmatprep.subr.bf16.mxu0 0
        %339 = vmatpush1.bf16.msra.mxu0 0
        %340 = vmatprep.mubr.bf16.mxu0 0
        %341 = vmatmul.mubr.bf16.gmra.mrb[0].mxu0 %v244
        %v342 = vpop.f32.mrb[0].mxu0
        %v343 = vadd.f32 0.0, %v342
        %v344 = vpop.f32.mrb[0].mxu0
        %v345 = vpop.f32.mrb[0].mxu0
        %v346 = vadd.f32 0.0, %v345
        %v347 = vpop.f32.mrb[0].mxu0
        %348 = vmatprep.mubr.bf16.mxu0 0
        %349 = vmatmul.mubr.bf16.gmra.mrb[0].mxu0 %v245
        %v350 = vpop.f32.mrb[0].mxu0
        %v351 = vadd.f32 0.0, %v350
        %v352 = vpop.f32.mrb[0].mxu0
        %v353 = vpop.f32.mrb[0].mxu0
        %v354 = vadd.f32 0.0, %v353
        %v355 = vpop.f32.mrb[0].mxu0
        %356 = vmatprep.mubr.bf16.mxu0 0
        %357 = vmatmul.mubr.bf16.gmra.mrb[0].mxu0 %v246
        %v358 = vpop.f32.mrb[0].mxu0
        %v359 = vadd.f32 0.0, %v358
        %v360 = vpop.f32.mrb[0].mxu0
        %v361 = vpop.f32.mrb[0].mxu0
        %v362 = vadd.f32 0.0, %v361
        %v363 = vpop.f32.mrb[0].mxu0
        %364 = vmatprep.mubr.bf16.mxu0 0
        %365 = vmatmul.mubr.bf16.gmra.mrb[0].mxu0 %v247
        %v366 = vpop.f32.mrb[0].mxu0
        %v367 = vadd.f32 0.0, %v366
        %v368 = vpop.f32.mrb[0].mxu0
        %v369 = vpop.f32.mrb[0].mxu0
        %v370 = vadd.f32 0.0, %v369
        %v371 = vpop.f32.mrb[0].mxu0
        %372 = vmatprep.mubr.bf16.mxu0 0
        %373 = vmatmul.mubr.bf16.gmra.mrb[0].mxu0 %v248
        %v374 = vpop.f32.mrb[0].mxu0
        %v375 = vadd.f32 0.0, %v374
        %v376 = vpop.f32.mrb[0].mxu0
        %v377 = vpop.f32.mrb[0].mxu0
        %v378 = vadd.f32 0.0, %v377
        %v379 = vpop.f32.mrb[0].mxu0
        %380 = vmatprep.mubr.bf16.mxu0 0
        %381 = vmatmul.mubr.bf16.gmra.mrb[0].mxu0 %v249
        %v382 = vpop.f32.mrb[0].mxu0
        %v383 = vadd.f32 0.0, %v382
        %v384 = vpop.f32.mrb[0].mxu0
        %v385 = vpop.f32.mrb[0].mxu0
        %v386 = vadd.f32 0.0, %v385
        %v387 = vpop.f32.mrb[0].mxu0
        %388 = vmatprep.mubr.bf16.mxu0 0
        %389 = vmatmul.mubr.bf16.gmra.mrb[0].mxu0 %v250
        %v390 = vpop.f32.mrb[0].mxu0
        %v391 = vadd.f32 0.0, %v390
        %v392 = vpop.f32.mrb[0].mxu0
        %v393 = vpop.f32.mrb[0].mxu0
        %v394 = vadd.f32 0.0, %v393
        %v395 = vpop.f32.mrb[0].mxu0
        %396 = vmatprep.mubr.bf16.mxu0 0
        %397 = vmatmul.mubr.bf16.gmra.mrb[0].mxu0 %v251
        %v398 = vpop.f32.mrb[0].mxu0
        %v399 = vadd.f32 0.0, %v398
        %v400 = vpop.f32.mrb[0].mxu0
        %v401 = vpop.f32.mrb[0].mxu0
        %v402 = vadd.f32 0.0, %v401
        %v403 = vpop.f32.mrb[0].mxu0
        %404 = vdwg.mxu0
        %v405 = vpack.c.bf16 %v346, %v343
        %v406 = vpack.c.bf16 %v354, %v351
        %v407 = vpack.c.bf16 %v362, %v359
        %v408 = vpack.c.bf16 %v370, %v367
        %v409 = vpack.c.bf16 %v378, %v375
        %v410 = vpack.c.bf16 %v386, %v383
        %v411 = vpack.c.bf16 %v394, %v391
        %v412 = vpack.c.bf16 %v402, %v399
        %v421 = vunpack.c.l.b16 %v405
        %v422 = vunpack.c.h.b16 %v405
        %v423 = vunpack.c.l.b16 %v406
        %v424 = vunpack.c.h.b16 %v406
        %v425 = vunpack.c.l.b16 %v407
        %v426 = vunpack.c.h.b16 %v407
        %v427 = vunpack.c.l.b16 %v408
        %v428 = vunpack.c.h.b16 %v408
        %v429 = vunpack.c.l.b16 %v409
        %v430 = vunpack.c.h.b16 %v409
        %v431 = vunpack.c.l.b16 %v410
        %v432 = vunpack.c.h.b16 %v410
        %v433 = vunpack.c.l.b16 %v411
        %v434 = vunpack.c.h.b16 %v411
        %v435 = vunpack.c.l.b16 %v412
        %v436 = vunpack.c.h.b16 %v412
        %v437 = vpack.c.b16 %v421, %v421
        %v438 = vpack.c.b16 %v422, %v422
        %v439 = vpack.c.b16 %v423, %v423
        %v440 = vpack.c.b16 %v424, %v424
        %v441 = vpack.c.b16 %v425, %v425
        %v442 = vpack.c.b16 %v426, %v426
        %v443 = vpack.c.b16 %v427, %v427
        %v444 = vpack.c.b16 %v428, %v428
        %v445 = vpack.c.b16 %v429, %v429
        %v446 = vpack.c.b16 %v430, %v430
        %v447 = vpack.c.b16 %v431, %v431
        %v448 = vpack.c.b16 %v432, %v432
        %v449 = vpack.c.b16 %v433, %v433
        %v450 = vpack.c.b16 %v434, %v434
        %v451 = vpack.c.b16 %v435, %v435
        %v452 = vpack.c.b16 %v436, %v436
        %469 = vst [vmem:[%s176] sm:$0xf] %v437
        %470 = vst [vmem:[%s176 + $0x4] sm:$0xf] %v438
        %471 = vst [vmem:[%s176 + $0x8] sm:$0xf] %v439
        %472 = vst [vmem:[%s176 + $0xc] sm:$0xf] %v440
        %473 = vst [vmem:[%s176 + $0x10] sm:$0xf] %v441
        %474 = vst [vmem:[%s176 + $0x14] sm:$0xf] %v442
        %475 = vst [vmem:[%s176 + $0x18] sm:$0xf] %v443
        %476 = vst [vmem:[%s176 + $0x1c] sm:$0xf] %v444
        %477 = vst [vmem:[%s176 + $0x20] sm:$0xf] %v445
        %478 = vst [vmem:[%s176 + $0x24] sm:$0xf] %v446
        %479 = vst [vmem:[%s176 + $0x28] sm:$0xf] %v447
        %480 = vst [vmem:[%s176 + $0x2c] sm:$0xf] %v448
        %481 = vst [vmem:[%s176 + $0x30] sm:$0xf] %v449
        %482 = vst [vmem:[%s176 + $0x34] sm:$0xf] %v450
        %483 = vst [vmem:[%s176 + $0x38] sm:$0xf] %v451
        %484 = vst [vmem:[%s176 + $0x3c] sm:$0xf] %v452
        %s485 = sand.u32 %s75, 1
        %s486 = scalar_lea.sflag [#allocation4], %s485
        %s487 = sand.u32 %s75, 1
        %s488 = smul.addr %s487, 64
        %s489 = scalar_lea.vmem [#allocation7], %s488
        // Predicated region
        $region37: #{tpu_custom_call.1} parent=27 // pred_check
          %p490 = pneg %p85
        $region38: #{tpu_custom_call.1} parent=27 // pred_check_branch
          %492 = sbr.rel (%p490) target = $region40
        $region39: #{tpu_custom_call.1} parent=27 // pred_region
          %s493 = smul.u32 16, %s20
          %s495 = ssub.s32 1024, 1024
          %496 = vsyncadd %s486, %s495
          %s497 = smul.addr %s493, 64
          %s498 = scalar_lea.hbm %s2, %s497
          %s499 = sshll.u32 %s489, 4
          %s500 = int_to_ptr.vmem [resolvable:$true] %s499
          %505 = dma.vmem_to_hbm [thread:$0]  %s500, 1024, %s498, %s486, 64, 64, 4
        $region40: #{tpu_custom_call.1} parent=27 // pred_fallthru
          _
      $region28: #{tpu_custom_call.1} parent=5 // pred_fallthru
        _
      %p506 = scmp.le.s32.totalorder 2, %s15
      // Predicated region
      $region41: #{tpu_custom_call.1} parent=5 // pred_check
        %p507 = pneg %p506
      $region42: #{tpu_custom_call.1} parent=5 // pred_check_branch
        %509 = sbr.rel (%p507) target = $region44
      $region43: #{tpu_custom_call.1} parent=5 // pred_region
        %s510 = ssub.s32 %s15, 2
        // Predicated region
        $region45: #{tpu_custom_call.1} parent=43 // pred_check
          %p511 = pneg %p91
        $region46: #{tpu_custom_call.1} parent=43 // pred_check_branch
          %513 = sbr.rel (%p511) target = $region48
        $region47: #{tpu_custom_call.1} parent=43 // pred_region
          %s514 = sand.u32 %s76, 1
          %s515 = scalar_lea.sflag [#allocation4], %s514
          %s516 = sand.u32 %s76, 1
          %s517 = smul.addr %s516, 64
          %s518 = scalar_lea.vmem [#allocation7], %s517
          %519 = dma.done %s515, 1024
        $region48: #{tpu_custom_call.1} parent=43 // pred_fallthru
          _
      $region44: #{tpu_custom_call.1} parent=5 // pred_fallthru
        _
    $region6: #{tpu_custom_call.1} parent=1 // loop_footer
      %s19 = sadd.s32 1, %s15
    $region7: #{tpu_custom_call.1} parent=1 // loop_footer_branch
      %14 = sbr.rel target = $region3
    $region8: #{tpu_custom_call.1} parent=1 // loop_exit
      _
    %520 = vsyncpa [#allocation3], 1
    %s521 = scalar_lea.sflag [#allocation3], 1
    %522 = vsyncpa %s521, 1
    %523 = vsyncpa [#allocation6], 1
    %524 = vsyncpa [#allocation4], 1
    %s525 = scalar_lea.sflag [#allocation4], 1
    %526 = vsyncpa %s525, 1

</llo_original>
